<compile_context>
chip_gen: v6e
topology: v6e:2x2x1
jax: 0.10.0
libtpu: 0.0.40
codegen_flags: <defaults>
</compile_context>

<pallas_src>
import functools

import jax
import jax.numpy as jnp
from jax.experimental import pallas as pl
from jax.experimental.pallas import tpu as pltpu


# -----------------------------------------------------------------------------
# Kernels
# -----------------------------------------------------------------------------
def _knrm_rbf_kernel(params_ref, x_ref, o_ref):
    """Single (mu, sigma) RBF kernel: exp(gamma * (x - mu)^2).

    params_ref: SMEM f32[2] = (mu, gamma), gamma = -0.5 / sigma^2 hoisted to the
    wrapper so exp is the only transcendental in the vector path.
    """
    mu = params_ref[0]
    gamma = params_ref[1]
    adj = x_ref[...].astype(jnp.float32) - mu
    o_ref[...] = jnp.exp(gamma * adj * adj).astype(o_ref.dtype)


def _knrm_rbf_bank_kernel(params_ref, x_ref, o_ref, *, num_kernels):
    """Fused bank of K RBF kernels on one resident x tile (x read once).

    params_ref: SMEM f32[K, 2] rows of (mu, gamma); o_ref block: (K, bm, cols).
    """
    x = x_ref[...].astype(jnp.float32)
    for k in range(num_kernels):  # K is tiny and static -> unrolled
        mu = params_ref[k, 0]
        gamma = params_ref[k, 1]
        adj = x - mu
        o_ref[k, ...] = jnp.exp(gamma * adj * adj).astype(o_ref.dtype)


# -----------------------------------------------------------------------------
# Layout / tiling helpers
# -----------------------------------------------------------------------------
def _chip_tuning():
    """Per-generation (input tile byte target, scoped VMEM limit)."""
    try:
        kind = jax.devices()[0].device_kind.lower()
    except Exception:  # pragma: no cover - conservative fallback
        kind = ""
    if "v7" in kind or "7x" in kind:
        return 6 * 1024 * 1024, 40 * 1024 * 1024   # 64 MiB/TC physical VMEM
    if "v6" in kind:
        return 4 * 1024 * 1024, 32 * 1024 * 1024   # 128 MiB physical VMEM
    # v5e and anything unknown: stay inside the 16 MiB default scoped VMEM.
    return 2 * 1024 * 1024, 16 * 1024 * 1024


def _to_slab(data):
    """Flatten to a lane-dense (rows, cols) slab, cols a multiple of 128.

    If the element count is not a multiple of 1024 the flat array is zero-padded
    (padding is computed on but sliced off afterwards); this avoids masked
    vst.msk partial stores from a non-128 lane width (e.g. D=100 inputs).
    """
    flat = data.reshape(-1)
    total = flat.shape[0]
    padded = -(-total // 1024) * 1024
    if padded != total:
        flat = jnp.pad(flat, (0, padded - total))
    cols = 1024
    for c in (4096, 2048):
        if padded % c == 0:
            cols = c
            break
    rows = padded // cols
    return flat.reshape(rows, cols), total


def _from_slab(out2, total, out_shape):
    flat = out2.reshape(-1)
    if flat.shape[0] != total:
        flat = flat[:total]
    return flat.reshape(out_shape)


def _pick_row_block(rows, bm_cap):
    """Rows per block: as big as the VMEM budget allows (multiple of 8), but with
    >= 8 blocks and an even block count when there is enough data so the two
    v7x TensorCores split the "parallel" axis evenly."""
    if rows < 8:
        return rows, 1
    bm = min(rows, bm_cap)
    bm = max(8, bm // 8 * 8)
    nblocks = -(-rows // bm)
    if rows >= 64:
        want = max(nblocks, 8)
        if want % 2:
            want += 1
        if want != nblocks:
            bm = max(8, ((-(-rows // want)) + 7) // 8 * 8)
            nblocks = -(-rows // bm)
    return bm, nblocks


def _compiler_params(vmem_limit):
    return pltpu.CompilerParams(
        dimension_semantics=("parallel",),
        vmem_limit_bytes=vmem_limit,
    )


# -----------------------------------------------------------------------------
# Public wrappers
# -----------------------------------------------------------------------------
def knrm_rbf(data, mu, sigma):
    """Forward of KNRMRbfKernel: exp(-0.5*(data - mu)^2 / sigma^2).

    data: any shape; mu, sigma: scalar (or shape-(1,)) parameters.
    """
    # TODO(synk): forward only; gradients for the trainable mu/sigma parameters
    # (requires_grad in the torch module) would need a custom VJP.
    shape = data.shape
    dtype = data.dtype
    itemsize = jnp.dtype(dtype).itemsize

    mu32 = jnp.asarray(mu, jnp.float32).reshape(-1)[0:1]
    sig32 = jnp.asarray(sigma, jnp.float32).reshape(-1)[0:1]
    gamma = (-0.5) / (sig32 * sig32)                       # hoisted scalar
    params = jnp.concatenate([mu32, gamma]).astype(jnp.float32)  # SMEM f32[2]

    x2, total = _to_slab(data)
    rows, cols = x2.shape

    target_bytes, vmem_limit = _chip_tuning()
    bm_cap = max(8, (target_bytes // (cols * itemsize)) // 8 * 8)
    bm, nblocks = _pick_row_block(rows, bm_cap)

    out2 = pl.pallas_call(
        _knrm_rbf_kernel,
        out_shape=jax.ShapeDtypeStruct((rows, cols), dtype),
        grid=(nblocks,),
        in_specs=[
            pl.BlockSpec(memory_space=pltpu.MemorySpace.SMEM),  # (mu, gamma)
            pl.BlockSpec((bm, cols), lambda i: (i, 0)),         # input slab
        ],
        out_specs=pl.BlockSpec((bm, cols), lambda i: (i, 0)),
        compiler_params=_compiler_params(vmem_limit),
    )(params, x2)

    return _from_slab(out2, total, shape)


def knrm_rbf_bank(data, mus, sigmas):
    """Fused bank of K KNRM RBF kernels.

    Reads `data` from HBM once and emits all K outputs, stacked on a new leading
    axis: result shape (K, *data.shape). This is the HBM-traffic-optimal way to
    run the full KNRM layer (vs. K separate elementwise calls).
    """
    shape = data.shape
    dtype = data.dtype
    itemsize = jnp.dtype(dtype).itemsize

    mus = jnp.asarray(mus, jnp.float32).reshape(-1)
    sigmas = jnp.asarray(sigmas, jnp.float32).reshape(-1)
    num_kernels = int(mus.shape[0])
    gammas = (-0.5) / (sigmas * sigmas)
    params = jnp.stack([mus, gammas], axis=1).astype(jnp.float32)  # SMEM f32[K,2]

    x2, total = _to_slab(data)
    rows, cols = x2.shape

    target_bytes, vmem_limit = _chip_tuning()
    # Keep total buffer bytes (2 input + 2*K output buffers) comparable to the
    # single-kernel case: shrink the input tile by ~(1+K)/2.
    eff_bytes = max(cols * itemsize, (2 * target_bytes) // (1 + num_kernels))
    bm_cap = max(8, (eff_bytes // (cols * itemsize)) // 8 * 8)
    bm, nblocks = _pick_row_block(rows, bm_cap)

    out = pl.pallas_call(
        functools.partial(_knrm_rbf_bank_kernel, num_kernels=num_kernels),
        out_shape=jax.ShapeDtypeStruct((num_kernels, rows, cols), dtype),
        grid=(nblocks,),
        in_specs=[
            pl.BlockSpec(memory_space=pltpu.MemorySpace.SMEM),
            pl.BlockSpec((bm, cols), lambda i: (i, 0)),
        ],
        out_specs=pl.BlockSpec((num_kernels, bm, cols), lambda i: (0, i, 0)),
        compiler_params=_compiler_params(vmem_limit),
    )(params, x2)

    flat = out.reshape(num_kernels, -1)
    if flat.shape[1] != total:
        flat = flat[:, :total]
    return flat.reshape((num_kernels,) + shape)


# -----------------------------------------------------------------------------
# Self-test
# -----------------------------------------------------------------------------
if __name__ == "__main__":
    initial_mu = 0.5
    initial_sigma = 0.1
    mu = jnp.array(initial_mu, dtype=jnp.float32)
    sigma = jnp.array(initial_sigma, dtype=jnp.float32)

    key = jax.random.PRNGKey(0)
    k1, k2 = jax.random.split(key)

    # (1) Module-shaped check: similarity matrix batch=2, qlen=8, dlen=128.
    data = jax.random.uniform(k1, (2, 8, 128), jnp.float32, -1.0, 1.0)
    out = jax.block_until_ready(knrm_rbf(data, mu, sigma))
    adj = data - initial_mu
    ref = jnp.exp(-0.5 * adj * adj / initial_sigma / initial_sigma)
    assert out.shape == data.shape and out.dtype == data.dtype
    assert jnp.allclose(out, ref, rtol=1e-6, atol=1e-6)

    # (2) Ragged lane check: dlen=100 is not a multiple of 128 -> padded slab.
    data_r = jax.random.uniform(k2, (2, 7, 100), jnp.float32, -1.0, 1.0)
    out_r = jax.block_until_ready(knrm_rbf(data_r, mu, sigma))
    adj_r = data_r - initial_mu
    ref_r = jnp.exp(-0.5 * adj_r * adj_r / initial_sigma / initial_sigma)
    assert out_r.shape == data_r.shape
    assert jnp.allclose(out_r, ref_r, rtol=1e-6, atol=1e-6)

    # (3) Fused K-kernel bank: reads `data` from HBM once for all K kernels.
    mus = jnp.array([-0.5, 0.0, 0.5], dtype=jnp.float32)
    sigmas = jnp.array([0.1, 0.1, 0.1], dtype=jnp.float32)
    bank = jax.block_until_ready(knrm_rbf_bank(data, mus, sigmas))
    assert bank.shape == (3,) + data.shape
    for i in range(3):
        a_i = data - mus[i]
        r_i = jnp.exp(-0.5 * a_i * a_i / sigmas[i] / sigmas[i])
        assert jnp.allclose(bank[i], r_i, rtol=1e-6, atol=1e-6)

    print("KERNEL_OK")
</pallas_src>

<mosaic_0001>
module attributes {stable_mosaic.version = 11 : i64} {
  func.func @_knrm_rbf_kernel(%arg0: i32, %arg1: memref<2xf32, #tpu.memory_space<smem>>, %arg2: memref<1x2048xf32, #tpu.memory_space<vmem>>, %arg3: memref<1x2048xf32, #tpu.memory_space<vmem>>) attributes {dimension_semantics = [#tpu.dimension_semantics<parallel>], iteration_bounds = array<i64: 1>, scalar_prefetch = 0 : i64, scratch_operands = 0 : i64, tpu.core_type = #tpu.core_type<tc>, window_params = [{transform_indices = @transform_0, window_bounds = array<i64: 2>}, {transform_indices = @transform_1, window_bounds = array<i64: 1, 2048>}, {transform_indices = @transform_2, window_bounds = array<i64: 1, 2048>}]} {
    %c0 = arith.constant 0 : index
    %0 = memref.load %arg1[%c0] : memref<2xf32, #tpu.memory_space<smem>>
    %c1 = arith.constant 1 : index
    %1 = memref.load %arg1[%c1] : memref<2xf32, #tpu.memory_space<smem>>
    %c0_0 = arith.constant 0 : index
    %c0_1 = arith.constant 0 : index
    %2 = vector.load %arg2[%c0_0, %c0_1] : memref<1x2048xf32, #tpu.memory_space<vmem>>, vector<1x2048xf32>
    %3 = vector.broadcast %0 : f32 to vector<1x2048xf32>
    %4 = arith.subf %2, %3 : vector<1x2048xf32>
    %5 = vector.broadcast %1 : f32 to vector<1x2048xf32>
    %6 = arith.mulf %5, %4 : vector<1x2048xf32>
    %7 = arith.mulf %6, %4 : vector<1x2048xf32>
    %8 = math.exp %7 : vector<1x2048xf32>
    %c0_2 = arith.constant 0 : index
    %c0_3 = arith.constant 0 : index
    %9 = vector.load %arg3[%c0_2, %c0_3] : memref<1x2048xf32, #tpu.memory_space<vmem>>, vector<1x2048xf32>
    tpu.vector_store %arg3[%c0_2, %c0_3], %8 {strides = array<i32>} : memref<1x2048xf32, #tpu.memory_space<vmem>>, vector<1x2048xf32>,
    return
  }
  func.func @transform_0(%arg0: i32) -> i32 {
    %c0_i32 = arith.constant 0 : i32
    %c0_i32_0 = arith.constant 0 : i32
    return %c0_i32 : i32
  }
  func.func @transform_1(%arg0: i32) -> (i32, i32) {
    %c0_i32 = arith.constant 0 : i32
    %c0_i32_0 = arith.constant 0 : i32
    return %arg0, %c0_i32 : i32, i32
  }
  func.func @transform_2(%arg0: i32) -> (i32, i32) {
    %c0_i32 = arith.constant 0 : i32
    %c0_i32_0 = arith.constant 0 : i32
    return %arg0, %c0_i32 : i32, i32
  }
}

</mosaic_0001>

<llo_original>
// kernel: tpu_custom_call.1
$region0: #{tpu_custom_call.1}
  #allocation0 [shape = 'u32[]', space=smem, size = 0x4, offset = 0x4, fixed_abs, tag = 'smem constant byte address 0x4 - core index']
  #allocation1 [shape = 'u32[144,128]{1,0:T(1,128)}', space=vmem, size = 0x12000, scoped, tag = 'internal scratch']
  %s0 = inlined_call_operand.hbm [shape: f32[2], index: 0, kind: input, shape index: {}]
  %s1 = inlined_call_operand.hbm [shape: f32[1,2048], index: 1, kind: input, shape index: {}]
  %s2 = inlined_call_operand.hbm [shape: f32[1,2048], index: 2, kind: output, shape index: {}]
  %s3 = sld [smem:[#allocation0]]
  $region26: #{tpu_custom_call.1} parent=0
    _
  %s5 = ssub.s32 1, %s3
  %s6 = scalar_select 0, %s5, %s3
  $region1: #{tpu_custom_call.1} parent=0
    #allocation2 [shape = 'u8[512]{0}', space=smem, size = 0x200, scoped, tag = 'input window, operand 0, single buffered']
    #allocation3 [shape = 's32[1]{0}', space=sflag, size = 0x4, scoped, tag = 'scoped memory for tpu_custom_call.1']
    #allocation4 [shape = 's32[1]{0}', space=sflag, size = 0x4, scoped, tag = 'scoped memory for tpu_custom_call.1']
    #allocation5 [shape = 's32[1]{0}', space=sflag, size = 0x4, scoped, tag = 'scoped memory for tpu_custom_call.1']
    #allocation6 [shape = 'u8[8192]{0}', space=vmem, size = 0x2000, scoped, tag = 'input window, operand 1, single buffered']
    #allocation7 [shape = 'u8[8192]{0}', space=vmem, size = 0x2000, scoped, tag = 'output window, operand 0, single buffered']
    %7 = vsyncpa [#allocation5], 0
    %8 = vsyncpa [#allocation3], 0
    %9 = vsyncpa [#allocation4], 0
    // Predicated region
    $region2: #{tpu_custom_call.1} parent=1 // pred_check
      _
    $region3: #{tpu_custom_call.1} parent=1 // pred_check_branch
      %11 = sbr.rel (0) target = $region5
    $region4: #{tpu_custom_call.1} parent=1 // pred_region
      %s13 = ssub.s32 16, 16
      %14 = vsyncadd [#allocation5], %s13
      %17 = dma.hbm_to_smem %s0, 16, [#allocation2], [#allocation5]
    $region5: #{tpu_custom_call.1} parent=1 // pred_fallthru
      _
    // Predicated region
    $region6: #{tpu_custom_call.1} parent=1 // pred_check
      _
    $region7: #{tpu_custom_call.1} parent=1 // pred_check_branch
      %19 = sbr.rel (0) target = $region9
    $region8: #{tpu_custom_call.1} parent=1 // pred_region
      %s21 = ssub.s32 256, 256
      %22 = vsyncadd [#allocation3], %s21
      %s24 = sshll.u32 [#allocation6], 4
      %s25 = int_to_ptr.vmem [resolvable:$true] %s24
      %27 = dma.hbm_to_vmem [thread:$0]  %s1, 256, %s25, [#allocation3]
    $region9: #{tpu_custom_call.1} parent=1 // pred_fallthru
      _
    // Predicated region
    $region10: #{tpu_custom_call.1} parent=1 // pred_check
      _
    $region11: #{tpu_custom_call.1} parent=1 // pred_check_branch
      %29 = sbr.rel (0) target = $region13
    $region12: #{tpu_custom_call.1} parent=1 // pred_region
      %30 = dma.done [#allocation5], 16
    $region13: #{tpu_custom_call.1} parent=1 // pred_fallthru
      _
    // Predicated region
    $region14: #{tpu_custom_call.1} parent=1 // pred_check
      _
    $region15: #{tpu_custom_call.1} parent=1 // pred_check_branch
      %32 = sbr.rel (0) target = $region17
    $region16: #{tpu_custom_call.1} parent=1 // pred_region
      %33 = dma.done [#allocation3], 256
    $region17: #{tpu_custom_call.1} parent=1 // pred_fallthru
      _
    %34 = sfence
    %s35 = sld [smem:[#allocation2]]
    %s36 = sld [smem:[#allocation2 + $0x1]]
    %v37 = vld [vmem:[#allocation6] sm:$0xff]
    %v38 = vld [vmem:[#allocation6 + $0x8] sm:$0xff]
    %v39 = vstv %s35
    %v40 = vsub.f32 %v37, %v39
    %v41 = vsub.f32 %v38, %v39
    %v42 = vstv %s36
    %v43 = vmul.f32 %v42, %v40
    %v44 = vmul.f32 %v42, %v41
    %v45 = vmul.f32 %v43, %v40
    %v46 = vmul.f32 %v44, %v41
    %v47 = vmul.f32 %v45, 1.442695
    %v48 = vpow.pop %v47
    %v49 = vmul.f32 %v46, 1.442695
    %v50 = vpow.pop %v49
    %51 = vst [vmem:[#allocation7] sm:$0xff] %v48
    %52 = vst [vmem:[#allocation7 + $0x8] sm:$0xff] %v50
    // Predicated region
    $region18: #{tpu_custom_call.1} parent=1 // pred_check
      _
    $region19: #{tpu_custom_call.1} parent=1 // pred_check_branch
      %54 = sbr.rel (0) target = $region21
    $region20: #{tpu_custom_call.1} parent=1 // pred_region
      %s56 = ssub.s32 256, 256
      %57 = vsyncadd [#allocation4], %s56
      %s59 = sshll.u32 [#allocation7], 4
      %s60 = int_to_ptr.vmem [resolvable:$true] %s59
      %62 = dma.vmem_to_hbm [thread:$0]  %s60, 256, %s2, [#allocation4]
    $region21: #{tpu_custom_call.1} parent=1 // pred_fallthru
      _
    // Predicated region
    $region22: #{tpu_custom_call.1} parent=1 // pred_check
      _
    $region23: #{tpu_custom_call.1} parent=1 // pred_check_branch
      %64 = sbr.rel (0) target = $region25
    $region24: #{tpu_custom_call.1} parent=1 // pred_region
      %65 = dma.done [#allocation4], 256
    $region25: #{tpu_custom_call.1} parent=1 // pred_fallthru
      _
    %66 = vsyncpa [#allocation3], 1
    %67 = vsyncpa [#allocation4], 1
    %68 = vsyncpa [#allocation5], 1

</llo_original>
